<compile_context>
chip_gen: v6e
topology: v6e:2x2x1
jax: 0.10.0
libtpu: 0.0.40
codegen_flags: <defaults>
</compile_context>

<pallas_src>
import jax
import jax.numpy as jnp
from jax.experimental import pallas as pl
from jax.experimental.pallas import tpu as pltpu

BATCH = 16
LATENT = 10
HID = 32                      # uniform in-kernel lane width for all layers
DIMS = [LATENT, 32, 16, 8, 1]
BN_EPS = 1e-5
LRELU_SLOPE = 0.2


def disc_latent_kernel(x_ref, w_ref, vec_ref, o_ref):
    # x_ref   : (BATCH, HID)   bf16 -- latent padded 10 -> 32 with zeros
    # w_ref   : (3, HID, HID)  bf16 -- W1/W2/W3, each zero-padded to 32x32
    # vec_ref : (8, HID)       f32  -- rows: g1, be1, g2, be2, g3, be3, w4, b4
    # o_ref   : (BATCH, 1)     f32
    h_mxu = x_ref[...]                       # bf16 MXU operand
    hf = None                                # f32 activation

    for layer in range(3):                   # statically unrolled
        z = jnp.dot(h_mxu, w_ref[layer], preferred_element_type=jnp.float32)
        gamma = vec_ref[2 * layer:2 * layer + 1, :]
        beta = vec_ref[2 * layer + 1:2 * layer + 2, :]
        # Training-mode BatchNorm1d (biased variance over batch), fused form.
        mean = jnp.mean(z, axis=0, keepdims=True)
        mean_sq = jnp.mean(z * z, axis=0, keepdims=True)
        var = jnp.maximum(mean_sq - mean * mean, 0.0)
        scale = gamma * jax.lax.rsqrt(var + BN_EPS)
        shift = beta - mean * scale
        hn = z * scale + shift
        hf = jnp.where(hn > 0, hn, LRELU_SLOPE * hn)   # LeakyReLU(0.2)
        h_mxu = hf.astype(jnp.bfloat16)                # next MXU operand

    # op4: Linear(8 -> 1) + Sigmoid, kept off the MXU (VPU mul + lane reduce).
    w4_row = vec_ref[6:7, :]                 # (1, HID), zeros beyond lane 8
    b4 = vec_ref[7:8, 0:1]                   # (1, 1)
    logits = jnp.sum(hf * w4_row, axis=-1, keepdims=True) + b4
    o_ref[...] = jax.nn.sigmoid(logits)


def make_params(key):
    """Deterministic PyTorch-style init: Linear W, b ~ U(-1/sqrt(fan_in), +);
    BatchNorm gamma=1, beta=0.  b1..b3 are created (to mirror PyTorch) but the
    kernel never consumes them — they are cancelled by the BN mean subtraction."""
    params = []
    for i in range(4):
        fan_in, fan_out = DIMS[i], DIMS[i + 1]
        key, kw, kb = jax.random.split(key, 3)
        bound = 1.0 / jnp.sqrt(float(fan_in))
        # stored as (in, out) == W.T relative to PyTorch's (out, in)
        w = jax.random.uniform(kw, (fan_in, fan_out), jnp.float32, -bound, bound)
        b = jax.random.uniform(kb, (1, fan_out), jnp.float32, -bound, bound)
        params.append((w, b))
    bn = []
    for d in DIMS[1:4]:
        bn.append((jnp.ones((1, d), jnp.float32), jnp.zeros((1, d), jnp.float32)))
    return params, bn


def _pack_operands(x, params, bn):
    """Pack the 15 logical operands into 3 kernel operands (done once per call;
    in a real training loop this would be hoisted/amortized across steps)."""
    (w1, _b1), (w2, _b2), (w3, _b3), (w4, b4) = params
    (g1, be1), (g2, be2), (g3, be3) = bn

    x2d = x.reshape(BATCH, LATENT).astype(jnp.float32)
    x_pad = jnp.zeros((BATCH, HID), jnp.float32).at[:, :LATENT].set(x2d)
    x_pad = x_pad.astype(jnp.bfloat16)

    wslab = jnp.zeros((3, HID, HID), jnp.float32)
    wslab = wslab.at[0, :LATENT, :32].set(w1)
    wslab = wslab.at[1, :32, :16].set(w2)
    wslab = wslab.at[2, :16, :8].set(w3)
    wslab = wslab.astype(jnp.bfloat16)

    vec = jnp.zeros((8, HID), jnp.float32)
    vec = vec.at[0, :32].set(g1.reshape(-1))
    vec = vec.at[1, :32].set(be1.reshape(-1))
    vec = vec.at[2, :16].set(g2.reshape(-1))
    vec = vec.at[3, :16].set(be2.reshape(-1))
    vec = vec.at[4, :8].set(g3.reshape(-1))
    vec = vec.at[5, :8].set(be3.reshape(-1))
    vec = vec.at[6, :8].set(w4.reshape(-1))
    vec = vec.at[7, :].set(b4[0, 0])
    return x_pad, wslab, vec


@jax.jit
def discriminator_latent(x, params, bn):
    x_pad, wslab, vec = _pack_operands(x, params, bn)
    vmem = pl.BlockSpec(memory_space=pltpu.MemorySpace.VMEM)
    out2d = pl.pallas_call(
        disc_latent_kernel,
        out_shape=jax.ShapeDtypeStruct((BATCH, 1), jnp.float32),
        in_specs=[vmem, vmem, vmem],
        out_specs=vmem,
    )(x_pad, wslab, vec)
    return out2d.reshape(BATCH, 1, 1, 1)


def _reference(x, params, bn):
    """Pure-JAX f32 reference with full PyTorch semantics (biases included)."""
    h = x.reshape(BATCH, LATENT).astype(jnp.float32)
    (w1, b1), (w2, b2), (w3, b3), (w4, b4) = params
    for (w, b), (g, be) in zip([(w1, b1), (w2, b2), (w3, b3)], bn):
        h = h @ w + b
        m = h.mean(0, keepdims=True)
        v = ((h - m) ** 2).mean(0, keepdims=True)
        h = (h - m) / jnp.sqrt(v + BN_EPS) * g + be
        h = jnp.where(h > 0, h, LRELU_SLOPE * h)
    h = jax.nn.sigmoid(h @ w4 + b4)
    return h.reshape(BATCH, 1, 1, 1)


if __name__ == "__main__":
    key = jax.random.PRNGKey(0)
    key, kx = jax.random.split(key)
    x = jax.random.normal(kx, (BATCH, LATENT), jnp.float32)

    params, bn = make_params(key)

    out = discriminator_latent(x, params, bn)
    out = jax.block_until_ready(out)

    ref = _reference(x, params, bn)
    assert out.shape == (BATCH, 1, 1, 1)
    # Tolerance loosened vs. 1e-5: kernel uses bf16 MXU operands and the
    # E[h^2]-mean^2 variance form (still well within 2e-2 on sigmoid outputs).
    assert jnp.allclose(out, ref, atol=2e-2, rtol=2e-2), "mismatch vs reference"

    print("KERNEL_OK")
</pallas_src>

<mosaic_0001>
module attributes {stable_mosaic.version = 11 : i64} {
  func.func @disc_latent_kernel(%arg0: memref<16x32xbf16, #tpu.memory_space<vmem>>, %arg1: memref<3x32x32xbf16, #tpu.memory_space<vmem>>, %arg2: memref<8x32xf32, #tpu.memory_space<vmem>>, %arg3: memref<16x1xf32, #tpu.memory_space<vmem>>) attributes {dimension_semantics = [], scalar_prefetch = 0 : i64, scratch_operands = 0 : i64, tpu.core_type = #tpu.core_type<tc>} {
    %c0 = arith.constant 0 : index
    %c0_0 = arith.constant 0 : index
    %0 = vector.load %arg0[%c0, %c0_0] : memref<16x32xbf16, #tpu.memory_space<vmem>>, vector<16x32xbf16>
    %c0_1 = arith.constant 0 : index
    %c0_2 = arith.constant 0 : index
    %c0_3 = arith.constant 0 : index
    %1 = vector.load %arg1[%c0_1, %c0_2, %c0_3] : memref<3x32x32xbf16, #tpu.memory_space<vmem>>, vector<1x32x32xbf16>
    %2 = vector.shape_cast %1 : vector<1x32x32xbf16> to vector<32x32xbf16>
    %cst = arith.constant dense<0.000000e+00> : vector<16x32xf32>
    %3 = tpu.matmul %0, %2, %cst {dimension_numbers = #tpu.dot_dimension_numbers<[1], [0], [0], [1], [0, 0, 1, 1], [], []>} : vector<16x32xbf16>, vector<32x32xbf16>, vector<16x32xf32> -> vector<16x32xf32>
    %c0_4 = arith.constant 0 : index
    %c0_5 = arith.constant 0 : index
    %4 = vector.load %arg2[%c0_4, %c0_5] : memref<8x32xf32, #tpu.memory_space<vmem>>, vector<1x32xf32>
    %c1 = arith.constant 1 : index
    %c0_6 = arith.constant 0 : index
    %5 = vector.load %arg2[%c1, %c0_6] : memref<8x32xf32, #tpu.memory_space<vmem>>, vector<1x32xf32>
    %cst_7 = arith.constant dense<0.000000e+00> : vector<32xf32>
    %6 = vector.multi_reduction <add>, %3, %cst_7 [0] : vector<16x32xf32> to vector<32xf32>
    %7 = vector.shape_cast %6 : vector<32xf32> to vector<1x32xf32>
    %cst_8 = arith.constant 1.600000e+01 : f32
    %8 = vector.broadcast %cst_8 : f32 to vector<1x32xf32>
    %9 = arith.divf %7, %8 : vector<1x32xf32>
    %10 = arith.mulf %3, %3 : vector<16x32xf32>
    %cst_9 = arith.constant dense<0.000000e+00> : vector<32xf32>
    %11 = vector.multi_reduction <add>, %10, %cst_9 [0] : vector<16x32xf32> to vector<32xf32>
    %12 = vector.shape_cast %11 : vector<32xf32> to vector<1x32xf32>
    %cst_10 = arith.constant 1.600000e+01 : f32
    %13 = vector.broadcast %cst_10 : f32 to vector<1x32xf32>
    %14 = arith.divf %12, %13 : vector<1x32xf32>
    %15 = arith.mulf %9, %9 : vector<1x32xf32>
    %16 = arith.subf %14, %15 : vector<1x32xf32>
    %cst_11 = arith.constant 0.000000e+00 : f32
    %17 = vector.broadcast %cst_11 : f32 to vector<1x32xf32>
    %18 = arith.maximumf %16, %17 : vector<1x32xf32>
    %cst_12 = arith.constant 9.99999974E-6 : f32
    %19 = vector.broadcast %cst_12 : f32 to vector<1x32xf32>
    %20 = arith.addf %18, %19 : vector<1x32xf32>
    %21 = math.rsqrt %20 : vector<1x32xf32>
    %22 = arith.mulf %4, %21 : vector<1x32xf32>
    %23 = arith.mulf %9, %22 : vector<1x32xf32>
    %24 = arith.subf %5, %23 : vector<1x32xf32>
    %25 = vector.broadcast %22 : vector<1x32xf32> to vector<16x32xf32>
    %26 = arith.mulf %3, %25 : vector<16x32xf32>
    %27 = vector.broadcast %24 : vector<1x32xf32> to vector<16x32xf32>
    %28 = arith.addf %26, %27 : vector<16x32xf32>
    %cst_13 = arith.constant 0.000000e+00 : f32
    %29 = vector.broadcast %cst_13 : f32 to vector<16x32xf32>
    %30 = arith.cmpf ogt, %28, %29 : vector<16x32xf32>
    %cst_14 = arith.constant 2.000000e-01 : f32
    %31 = vector.broadcast %cst_14 : f32 to vector<16x32xf32>
    %32 = arith.mulf %31, %28 : vector<16x32xf32>
    %33 = arith.select %30, %28, %32 : vector<16x32xi1>, vector<16x32xf32>
    %34 = arith.truncf %33 : vector<16x32xf32> to vector<16x32xbf16>
    %c1_15 = arith.constant 1 : index
    %c0_16 = arith.constant 0 : index
    %c0_17 = arith.constant 0 : index
    %35 = vector.load %arg1[%c1_15, %c0_16, %c0_17] : memref<3x32x32xbf16, #tpu.memory_space<vmem>>, vector<1x32x32xbf16>
    %36 = vector.shape_cast %35 : vector<1x32x32xbf16> to vector<32x32xbf16>
    %cst_18 = arith.constant dense<0.000000e+00> : vector<16x32xf32>
    %37 = tpu.matmul %34, %36, %cst_18 {dimension_numbers = #tpu.dot_dimension_numbers<[1], [0], [0], [1], [0, 0, 1, 1], [], []>} : vector<16x32xbf16>, vector<32x32xbf16>, vector<16x32xf32> -> vector<16x32xf32>
    %c2 = arith.constant 2 : index
    %c0_19 = arith.constant 0 : index
    %38 = vector.load %arg2[%c2, %c0_19] : memref<8x32xf32, #tpu.memory_space<vmem>>, vector<1x32xf32>
    %c3 = arith.constant 3 : index
    %c0_20 = arith.constant 0 : index
    %39 = vector.load %arg2[%c3, %c0_20] : memref<8x32xf32, #tpu.memory_space<vmem>>, vector<1x32xf32>
    %cst_21 = arith.constant dense<0.000000e+00> : vector<32xf32>
    %40 = vector.multi_reduction <add>, %37, %cst_21 [0] : vector<16x32xf32> to vector<32xf32>
    %41 = vector.shape_cast %40 : vector<32xf32> to vector<1x32xf32>
    %cst_22 = arith.constant 1.600000e+01 : f32
    %42 = vector.broadcast %cst_22 : f32 to vector<1x32xf32>
    %43 = arith.divf %41, %42 : vector<1x32xf32>
    %44 = arith.mulf %37, %37 : vector<16x32xf32>
    %cst_23 = arith.constant dense<0.000000e+00> : vector<32xf32>
    %45 = vector.multi_reduction <add>, %44, %cst_23 [0] : vector<16x32xf32> to vector<32xf32>
    %46 = vector.shape_cast %45 : vector<32xf32> to vector<1x32xf32>
    %cst_24 = arith.constant 1.600000e+01 : f32
    %47 = vector.broadcast %cst_24 : f32 to vector<1x32xf32>
    %48 = arith.divf %46, %47 : vector<1x32xf32>
    %49 = arith.mulf %43, %43 : vector<1x32xf32>
    %50 = arith.subf %48, %49 : vector<1x32xf32>
    %cst_25 = arith.constant 0.000000e+00 : f32
    %51 = vector.broadcast %cst_25 : f32 to vector<1x32xf32>
    %52 = arith.maximumf %50, %51 : vector<1x32xf32>
    %cst_26 = arith.constant 9.99999974E-6 : f32
    %53 = vector.broadcast %cst_26 : f32 to vector<1x32xf32>
    %54 = arith.addf %52, %53 : vector<1x32xf32>
    %55 = math.rsqrt %54 : vector<1x32xf32>
    %56 = arith.mulf %38, %55 : vector<1x32xf32>
    %57 = arith.mulf %43, %56 : vector<1x32xf32>
    %58 = arith.subf %39, %57 : vector<1x32xf32>
    %59 = vector.broadcast %56 : vector<1x32xf32> to vector<16x32xf32>
    %60 = arith.mulf %37, %59 : vector<16x32xf32>
    %61 = vector.broadcast %58 : vector<1x32xf32> to vector<16x32xf32>
    %62 = arith.addf %60, %61 : vector<16x32xf32>
    %cst_27 = arith.constant 0.000000e+00 : f32
    %63 = vector.broadcast %cst_27 : f32 to vector<16x32xf32>
    %64 = arith.cmpf ogt, %62, %63 : vector<16x32xf32>
    %cst_28 = arith.constant 2.000000e-01 : f32
    %65 = vector.broadcast %cst_28 : f32 to vector<16x32xf32>
    %66 = arith.mulf %65, %62 : vector<16x32xf32>
    %67 = arith.select %64, %62, %66 : vector<16x32xi1>, vector<16x32xf32>
    %68 = arith.truncf %67 : vector<16x32xf32> to vector<16x32xbf16>
    %c2_29 = arith.constant 2 : index
    %c0_30 = arith.constant 0 : index
    %c0_31 = arith.constant 0 : index
    %69 = vector.load %arg1[%c2_29, %c0_30, %c0_31] : memref<3x32x32xbf16, #tpu.memory_space<vmem>>, vector<1x32x32xbf16>
    %70 = vector.shape_cast %69 : vector<1x32x32xbf16> to vector<32x32xbf16>
    %cst_32 = arith.constant dense<0.000000e+00> : vector<16x32xf32>
    %71 = tpu.matmul %68, %70, %cst_32 {dimension_numbers = #tpu.dot_dimension_numbers<[1], [0], [0], [1], [0, 0, 1, 1], [], []>} : vector<16x32xbf16>, vector<32x32xbf16>, vector<16x32xf32> -> vector<16x32xf32>
    %c4 = arith.constant 4 : index
    %c0_33 = arith.constant 0 : index
    %72 = vector.load %arg2[%c4, %c0_33] : memref<8x32xf32, #tpu.memory_space<vmem>>, vector<1x32xf32>
    %c5 = arith.constant 5 : index
    %c0_34 = arith.constant 0 : index
    %73 = vector.load %arg2[%c5, %c0_34] : memref<8x32xf32, #tpu.memory_space<vmem>>, vector<1x32xf32>
    %cst_35 = arith.constant dense<0.000000e+00> : vector<32xf32>
    %74 = vector.multi_reduction <add>, %71, %cst_35 [0] : vector<16x32xf32> to vector<32xf32>
    %75 = vector.shape_cast %74 : vector<32xf32> to vector<1x32xf32>
    %cst_36 = arith.constant 1.600000e+01 : f32
    %76 = vector.broadcast %cst_36 : f32 to vector<1x32xf32>
    %77 = arith.divf %75, %76 : vector<1x32xf32>
    %78 = arith.mulf %71, %71 : vector<16x32xf32>
    %cst_37 = arith.constant dense<0.000000e+00> : vector<32xf32>
    %79 = vector.multi_reduction <add>, %78, %cst_37 [0] : vector<16x32xf32> to vector<32xf32>
    %80 = vector.shape_cast %79 : vector<32xf32> to vector<1x32xf32>
    %cst_38 = arith.constant 1.600000e+01 : f32
    %81 = vector.broadcast %cst_38 : f32 to vector<1x32xf32>
    %82 = arith.divf %80, %81 : vector<1x32xf32>
    %83 = arith.mulf %77, %77 : vector<1x32xf32>
    %84 = arith.subf %82, %83 : vector<1x32xf32>
    %cst_39 = arith.constant 0.000000e+00 : f32
    %85 = vector.broadcast %cst_39 : f32 to vector<1x32xf32>
    %86 = arith.maximumf %84, %85 : vector<1x32xf32>
    %cst_40 = arith.constant 9.99999974E-6 : f32
    %87 = vector.broadcast %cst_40 : f32 to vector<1x32xf32>
    %88 = arith.addf %86, %87 : vector<1x32xf32>
    %89 = math.rsqrt %88 : vector<1x32xf32>
    %90 = arith.mulf %72, %89 : vector<1x32xf32>
    %91 = arith.mulf %77, %90 : vector<1x32xf32>
    %92 = arith.subf %73, %91 : vector<1x32xf32>
    %93 = vector.broadcast %90 : vector<1x32xf32> to vector<16x32xf32>
    %94 = arith.mulf %71, %93 : vector<16x32xf32>
    %95 = vector.broadcast %92 : vector<1x32xf32> to vector<16x32xf32>
    %96 = arith.addf %94, %95 : vector<16x32xf32>
    %cst_41 = arith.constant 0.000000e+00 : f32
    %97 = vector.broadcast %cst_41 : f32 to vector<16x32xf32>
    %98 = arith.cmpf ogt, %96, %97 : vector<16x32xf32>
    %cst_42 = arith.constant 2.000000e-01 : f32
    %99 = vector.broadcast %cst_42 : f32 to vector<16x32xf32>
    %100 = arith.mulf %99, %96 : vector<16x32xf32>
    %101 = arith.select %98, %96, %100 : vector<16x32xi1>, vector<16x32xf32>
    %c6 = arith.constant 6 : index
    %c0_43 = arith.constant 0 : index
    %102 = vector.load %arg2[%c6, %c0_43] : memref<8x32xf32, #tpu.memory_space<vmem>>, vector<1x32xf32>
    %c7 = arith.constant 7 : index
    %c0_44 = arith.constant 0 : index
    %103 = vector.load %arg2[%c7, %c0_44] : memref<8x32xf32, #tpu.memory_space<vmem>>, vector<1x1xf32>
    %104 = vector.broadcast %102 : vector<1x32xf32> to vector<16x32xf32>
    %105 = arith.mulf %101, %104 : vector<16x32xf32>
    %cst_45 = arith.constant dense<0.000000e+00> : vector<16xf32>
    %106 = vector.multi_reduction <add>, %105, %cst_45 [1] : vector<16x32xf32> to vector<16xf32>
    %107 = vector.shape_cast %106 : vector<16xf32> to vector<16x1xf32>
    %108 = vector.broadcast %103 : vector<1x1xf32> to vector<16x1xf32>
    %109 = arith.addf %107, %108 : vector<16x1xf32>
    %110 = arith.negf %109 : vector<16x1xf32>
    %111 = math.exp %110 : vector<16x1xf32>
    %cst_46 = arith.constant 1.000000e+00 : f32
    %112 = vector.broadcast %cst_46 : f32 to vector<16x1xf32>
    %113 = arith.addf %112, %111 : vector<16x1xf32>
    %114 = arith.divf %112, %113 : vector<16x1xf32>
    %c0_47 = arith.constant 0 : index
    %c0_48 = arith.constant 0 : index
    %115 = vector.load %arg3[%c0_47, %c0_48] : memref<16x1xf32, #tpu.memory_space<vmem>>, vector<16x1xf32>
    tpu.vector_store %arg3[%c0_47, %c0_48], %114 {strides = array<i32>} : memref<16x1xf32, #tpu.memory_space<vmem>>, vector<16x1xf32>,
    return
  }
}

</mosaic_0001>

<llo_original>
// kernel: discriminator_latent.1
$region0: #{discriminator_latent.1}
  #allocation0 [shape = 'u32[]', space=smem, size = 0x4, offset = 0x4, fixed_abs, tag = 'smem constant byte address 0x4 - core index']
  #allocation1 [shape = 'u32[144,128]{1,0:T(1,128)}', space=vmem, size = 0x12000, scoped, tag = 'internal scratch']
  %s0 = inlined_call_operand.vmem [shape: bf16[16,32], index: 0, kind: input, shape index: {}]
  %s1 = inlined_call_operand.vmem [shape: bf16[3,32,32], index: 1, kind: input, shape index: {}]
  %s2 = inlined_call_operand.vmem [shape: f32[8,32], index: 2, kind: input, shape index: {}]
  %s3 = inlined_call_operand.vmem [shape: f32[16,1], index: 3, kind: output, shape index: {}]
  %s4 = sld [smem:[#allocation0]]
  $region22: #{discriminator_latent.1} parent=0
    _
  %s6 = ssub.s32 1, %s4
  %s7 = scalar_select 0, %s6, %s4
  // Predicated region
  $region2: #{discriminator_latent.1} parent=0 // pred_check
    _
  $region3: #{discriminator_latent.1} parent=0 // pred_check_branch
    %9 = sbr.rel (0) target = $region5
  $region4: #{discriminator_latent.1} parent=0 // pred_region
    _
  $region5: #{discriminator_latent.1} parent=0 // pred_fallthru
    _
  // Predicated region
  $region6: #{discriminator_latent.1} parent=0 // pred_check
    _
  $region7: #{discriminator_latent.1} parent=0 // pred_check_branch
    %11 = sbr.rel (0) target = $region9
  $region8: #{discriminator_latent.1} parent=0 // pred_region
    _
  $region9: #{discriminator_latent.1} parent=0 // pred_fallthru
    _
  // Predicated region
  $region10: #{discriminator_latent.1} parent=0 // pred_check
    _
  $region11: #{discriminator_latent.1} parent=0 // pred_check_branch
    %13 = sbr.rel (0) target = $region13
  $region12: #{discriminator_latent.1} parent=0 // pred_region
    _
  $region13: #{discriminator_latent.1} parent=0 // pred_fallthru
    _
  %v15 = vld [vmem:[%s0] sm:$0xf]
  %v16 = vld [vmem:[%s0 + $0x4] sm:$0xf]
  %v17 = vld [vmem:[%s1] sm:$0xf]
  %v18 = vld [vmem:[%s1 + $0x4] sm:$0xf]
  %v19 = vld [vmem:[%s1 + $0x8] sm:$0xf]
  %v20 = vld [vmem:[%s1 + $0xc] sm:$0xf]
  %v23 = vunpack.c.l.b16 %v15
  %v24 = vunpack.c.l.b16 %v16
  %v25 = vpack.c.b16 %v24, %v23
  %v30 = vunpack.c.l.b16 %v17
  %v31 = vunpack.c.l.b16 %v18
  %v32 = vunpack.c.l.b16 %v19
  %v33 = vunpack.c.l.b16 %v20
  %v34 = vpack.c.b16 %v31, %v30
  %v35 = vpack.c.b16 %v33, %v32
  %vm38 = vcmask 261120
  %v40 = vsel %vm38, %v25, 0
  %42 = vmatprep.subr.bf16.mxu0 0
  %43 = vmatpush1.bf16.msra.mxu0 0
  %44 = vmatprep.subr.bf16.mxu0 0
  %45 = vmatpush1.bf16.msra.mxu0 0
  %46 = vmatprep.subr.bf16.mxu0 0
  %47 = vmatpush1.bf16.msra.mxu0 0
  %48 = vmatprep.subr.bf16.mxu0 0
  %49 = vmatpush1.bf16.msra.mxu0 0
  %50 = vmatprep.subr.bf16.mxu0 0
  %51 = vmatpush1.bf16.msra.mxu0 0
  %52 = vmatprep.subr.bf16.mxu0 0
  %53 = vmatpush1.bf16.msra.mxu0 0
  %54 = vmatprep.subr.bf16.mxu0 0
  %55 = vmatpush1.bf16.msra.mxu0 %v35
  %56 = vmatprep.subr.bf16.mxu0 0
  %57 = vmatpush1.bf16.msra.mxu0 %v34
  %58 = vmatprep.subr.bf16.mxu0 0
  %59 = vmatpush2.bf16.msra.mxu0 0
  %60 = vmatprep.subr.bf16.mxu0 0
  %61 = vmatpush2.bf16.msra.mxu0 0
  %62 = vmatprep.subr.bf16.mxu0 0
  %63 = vmatpush2.bf16.msra.mxu0 0
  %64 = vmatprep.subr.bf16.mxu0 0
  %65 = vmatpush2.bf16.msra.mxu0 0
  %66 = vmatprep.subr.bf16.mxu0 0
  %67 = vmatpush2.bf16.msra.mxu0 0
  %68 = vmatprep.subr.bf16.mxu0 0
  %69 = vmatpush2.bf16.msra.mxu0 0
  %70 = vmatprep.subr.bf16.mxu0 0
  %71 = vmatpush2.bf16.msra.mxu0 0
  %72 = vmatprep.subr.bf16.mxu0 0
  %73 = vmatpush2.bf16.msra.mxu0 0
  %74 = vmatprep.mubr.bf16.mxu0 0
  %75 = vmatmul.mubr.bf16.gmra.mxu0 %v40
  %v76 = vpop.f32.mrf.mxu0
  %v77 = vadd.f32 0.0, %v76
  %v78 = vpop.f32.mrf.mxu0
  %v79 = vpop.f32.mrf.mxu0
  %v80 = vadd.f32 0.0, %v79
  %v81 = vpop.f32.mrf.mxu0
  %82 = vdwg.mxu0
  %v83 = vld [vmem:[%s2] sm:$0x1]
  %v84 = vld [vmem:[%s2 + $0x1] sm:$0x1]
  %v85 = vsel %vm38, %v77, 0.0
  %v86 = vsel %vm38, %v80, 0.0
  %v87 = vadd.f32 %v85, %v86
  %v88 = vrot.slane %v87, 4
  %v89 = vadd.f32 %v87, %v88
  %v90 = vrot.slane %v89, 2
  %v91 = vadd.f32 %v89, %v90
  %v92 = vrot.slane %v91, 1
  %v93 = vadd.f32 %v91, %v92
  %v94 = vrcp.pop 16.0
  %v95 = vmul.f32 %v93, %v94
  %v96 = vmul.f32 %v77, %v77
  %v97 = vmul.f32 %v80, %v80
  %v98 = vsel %vm38, %v96, 0.0
  %v99 = vsel %vm38, %v97, 0.0
  %v100 = vadd.f32 %v98, %v99
  %v101 = vrot.slane %v100, 4
  %v102 = vadd.f32 %v100, %v101
  %v103 = vrot.slane %v102, 2
  %v104 = vadd.f32 %v102, %v103
  %v105 = vrot.slane %v104, 1
  %v106 = vadd.f32 %v104, %v105
  %v107 = vmul.f32 %v106, %v94
  %v108 = vmul.f32 %v95, %v95
  %v109 = vsub.f32 %v107, %v108
  %v110 = vmax.f32 %v109, 0.0
  %v111 = vadd.f32 %v110, 1e-05
  %v112 = vrsqrt.pop %v111
  %v113 = vmul.f32 %v83, %v112
  %v114 = vmul.f32 %v95, %v113
  %v115 = vsub.f32 %v84, %v114
  %v116 = vlaneseq
  %v117 = vshrl.u32 %v116, 7
  %v118 = vsub.s32 0, %v117
  %v119 = vrot.slane %v113, %v118
  %v120 = vmul.f32 %v77, %v119
  %v121 = vmul.f32 %v80, %v119
  %v122 = vlaneseq
  %v123 = vshrl.u32 %v122, 7
  %v124 = vsub.s32 0, %v123
  %v125 = vrot.slane %v115, %v124
  %v126 = vadd.f32 %v120, %v125
  %v127 = vadd.f32 %v121, %v125
  %vm128 = vcmp.gt.f32.partialorder %v126, 0.0
  %vm129 = vcmp.gt.f32.partialorder %v127, 0.0
  %v130 = vmul.f32 %v126, 0.2
  %v131 = vmul.f32 %v127, 0.2
  %v132 = vsel %vm128, %v126, %v130
  %v133 = vsel %vm129, %v127, %v131
  %v134 = vpack.c.bf16 %v133, %v132
  %s135 = scalar_lea.vmem %s1, 16
  %v136 = vld [vmem:[%s135] sm:$0xf]
  %v137 = vld [vmem:[%s135 + $0x4] sm:$0xf]
  %v138 = vld [vmem:[%s135 + $0x8] sm:$0xf]
  %v139 = vld [vmem:[%s135 + $0xc] sm:$0xf]
  %v144 = vunpack.c.l.b16 %v136
  %v145 = vunpack.c.l.b16 %v137
  %v146 = vunpack.c.l.b16 %v138
  %v147 = vunpack.c.l.b16 %v139
  %v148 = vpack.c.b16 %v145, %v144
  %v149 = vpack.c.b16 %v147, %v146
  %v153 = vsel %vm38, %v134, 0
  %155 = vmatprep.subr.bf16.mxu0 0
  %156 = vmatpush1.bf16.msra.mxu0 0
  %157 = vmatprep.subr.bf16.mxu0 0
  %158 = vmatpush1.bf16.msra.mxu0 0
  %159 = vmatprep.subr.bf16.mxu0 0
  %160 = vmatpush1.bf16.msra.mxu0 0
  %161 = vmatprep.subr.bf16.mxu0 0
  %162 = vmatpush1.bf16.msra.mxu0 0
  %163 = vmatprep.subr.bf16.mxu0 0
  %164 = vmatpush1.bf16.msra.mxu0 0
  %165 = vmatprep.subr.bf16.mxu0 0
  %166 = vmatpush1.bf16.msra.mxu0 0
  %167 = vmatprep.subr.bf16.mxu0 0
  %168 = vmatpush1.bf16.msra.mxu0 %v149
  %169 = vmatprep.subr.bf16.mxu0 0
  %170 = vmatpush1.bf16.msra.mxu0 %v148
  %171 = vmatprep.subr.bf16.mxu0 0
  %172 = vmatpush2.bf16.msra.mxu0 0
  %173 = vmatprep.subr.bf16.mxu0 0
  %174 = vmatpush2.bf16.msra.mxu0 0
  %175 = vmatprep.subr.bf16.mxu0 0
  %176 = vmatpush2.bf16.msra.mxu0 0
  %177 = vmatprep.subr.bf16.mxu0 0
  %178 = vmatpush2.bf16.msra.mxu0 0
  %179 = vmatprep.subr.bf16.mxu0 0
  %180 = vmatpush2.bf16.msra.mxu0 0
  %181 = vmatprep.subr.bf16.mxu0 0
  %182 = vmatpush2.bf16.msra.mxu0 0
  %183 = vmatprep.subr.bf16.mxu0 0
  %184 = vmatpush2.bf16.msra.mxu0 0
  %185 = vmatprep.subr.bf16.mxu0 0
  %186 = vmatpush2.bf16.msra.mxu0 0
  %187 = vmatprep.mubr.bf16.mxu0 0
  %188 = vmatmul.mubr.bf16.gmra.mxu0 %v153
  %v189 = vpop.f32.mrf.mxu0
  %v190 = vadd.f32 0.0, %v189
  %v191 = vpop.f32.mrf.mxu0
  %v192 = vpop.f32.mrf.mxu0
  %v193 = vadd.f32 0.0, %v192
  %v194 = vpop.f32.mrf.mxu0
  %195 = vdwg.mxu0
  %v196 = vld [vmem:[%s2 + $0x2] sm:$0x1]
  %v197 = vld [vmem:[%s2 + $0x3] sm:$0x1]
  %v198 = vsel %vm38, %v190, 0.0
  %v199 = vsel %vm38, %v193, 0.0
  %v200 = vadd.f32 %v198, %v199
  %v201 = vrot.slane %v200, 4
  %v202 = vadd.f32 %v200, %v201
  %v203 = vrot.slane %v202, 2
  %v204 = vadd.f32 %v202, %v203
  %v205 = vrot.slane %v204, 1
  %v206 = vadd.f32 %v204, %v205
  %v207 = vmul.f32 %v206, %v94
  %v208 = vmul.f32 %v190, %v190
  %v209 = vmul.f32 %v193, %v193
  %v210 = vsel %vm38, %v208, 0.0
  %v211 = vsel %vm38, %v209, 0.0
  %v212 = vadd.f32 %v210, %v211
  %v213 = vrot.slane %v212, 4
  %v214 = vadd.f32 %v212, %v213
  %v215 = vrot.slane %v214, 2
  %v216 = vadd.f32 %v214, %v215
  %v217 = vrot.slane %v216, 1
  %v218 = vadd.f32 %v216, %v217
  %v219 = vmul.f32 %v218, %v94
  %v220 = vmul.f32 %v207, %v207
  %v221 = vsub.f32 %v219, %v220
  %v222 = vmax.f32 %v221, 0.0
  %v223 = vadd.f32 %v222, 1e-05
  %v224 = vrsqrt.pop %v223
  %v225 = vmul.f32 %v196, %v224
  %v226 = vmul.f32 %v207, %v225
  %v227 = vsub.f32 %v197, %v226
  %v228 = vlaneseq
  %v229 = vshrl.u32 %v228, 7
  %v230 = vsub.s32 0, %v229
  %v231 = vrot.slane %v225, %v230
  %v232 = vmul.f32 %v190, %v231
  %v233 = vmul.f32 %v193, %v231
  %v234 = vlaneseq
  %v235 = vshrl.u32 %v234, 7
  %v236 = vsub.s32 0, %v235
  %v237 = vrot.slane %v227, %v236
  %v238 = vadd.f32 %v232, %v237
  %v239 = vadd.f32 %v233, %v237
  %vm240 = vcmp.gt.f32.partialorder %v238, 0.0
  %vm241 = vcmp.gt.f32.partialorder %v239, 0.0
  %v242 = vmul.f32 %v238, 0.2
  %v243 = vmul.f32 %v239, 0.2
  %v244 = vsel %vm240, %v238, %v242
  %v245 = vsel %vm241, %v239, %v243
  %v246 = vpack.c.bf16 %v245, %v244
  %s247 = scalar_lea.vmem %s1, 32
  %v248 = vld [vmem:[%s247] sm:$0xf]
  %v249 = vld [vmem:[%s247 + $0x4] sm:$0xf]
  %v250 = vld [vmem:[%s247 + $0x8] sm:$0xf]
  %v251 = vld [vmem:[%s247 + $0xc] sm:$0xf]
  %v256 = vunpack.c.l.b16 %v248
  %v257 = vunpack.c.l.b16 %v249
  %v258 = vunpack.c.l.b16 %v250
  %v259 = vunpack.c.l.b16 %v251
  %v260 = vpack.c.b16 %v257, %v256
  %v261 = vpack.c.b16 %v259, %v258
  %v265 = vsel %vm38, %v246, 0
  %267 = vmatprep.subr.bf16.mxu0 0
  %268 = vmatpush1.bf16.msra.mxu0 0
  %269 = vmatprep.subr.bf16.mxu0 0
  %270 = vmatpush1.bf16.msra.mxu0 0
  %271 = vmatprep.subr.bf16.mxu0 0
  %272 = vmatpush1.bf16.msra.mxu0 0
  %273 = vmatprep.subr.bf16.mxu0 0
  %274 = vmatpush1.bf16.msra.mxu0 0
  %275 = vmatprep.subr.bf16.mxu0 0
  %276 = vmatpush1.bf16.msra.mxu0 0
  %277 = vmatprep.subr.bf16.mxu0 0
  %278 = vmatpush1.bf16.msra.mxu0 0
  %279 = vmatprep.subr.bf16.mxu0 0
  %280 = vmatpush1.bf16.msra.mxu0 %v261
  %281 = vmatprep.subr.bf16.mxu0 0
  %282 = vmatpush1.bf16.msra.mxu0 %v260
  %283 = vmatprep.subr.bf16.mxu0 0
  %284 = vmatpush2.bf16.msra.mxu0 0
  %285 = vmatprep.subr.bf16.mxu0 0
  %286 = vmatpush2.bf16.msra.mxu0 0
  %287 = vmatprep.subr.bf16.mxu0 0
  %288 = vmatpush2.bf16.msra.mxu0 0
  %289 = vmatprep.subr.bf16.mxu0 0
  %290 = vmatpush2.bf16.msra.mxu0 0
  %291 = vmatprep.subr.bf16.mxu0 0
  %292 = vmatpush2.bf16.msra.mxu0 0
  %293 = vmatprep.subr.bf16.mxu0 0
  %294 = vmatpush2.bf16.msra.mxu0 0
  %295 = vmatprep.subr.bf16.mxu0 0
  %296 = vmatpush2.bf16.msra.mxu0 0
  %297 = vmatprep.subr.bf16.mxu0 0
  %298 = vmatpush2.bf16.msra.mxu0 0
  %299 = vmatprep.mubr.bf16.mxu0 0
  %300 = vmatmul.mubr.bf16.gmra.mxu0 %v265
  %v301 = vpop.f32.mrf.mxu0
  %v302 = vadd.f32 0.0, %v301
  %v303 = vpop.f32.mrf.mxu0
  %v304 = vpop.f32.mrf.mxu0
  %v305 = vadd.f32 0.0, %v304
  %v306 = vpop.f32.mrf.mxu0
  %307 = vdwg.mxu0
  %v308 = vld [vmem:[%s2 + $0x4] sm:$0x1]
  %v309 = vld [vmem:[%s2 + $0x5] sm:$0x1]
  %v310 = vsel %vm38, %v302, 0.0
  %v311 = vsel %vm38, %v305, 0.0
  %v312 = vadd.f32 %v310, %v311
  %v313 = vrot.slane %v312, 4
  %v314 = vadd.f32 %v312, %v313
  %v315 = vrot.slane %v314, 2
  %v316 = vadd.f32 %v314, %v315
  %v317 = vrot.slane %v316, 1
  %v318 = vadd.f32 %v316, %v317
  %v319 = vmul.f32 %v318, %v94
  %v320 = vmul.f32 %v302, %v302
  %v321 = vmul.f32 %v305, %v305
  %v322 = vsel %vm38, %v320, 0.0
  %v323 = vsel %vm38, %v321, 0.0
  %v324 = vadd.f32 %v322, %v323
  %v325 = vrot.slane %v324, 4
  %v326 = vadd.f32 %v324, %v325
  %v327 = vrot.slane %v326, 2
  %v328 = vadd.f32 %v326, %v327
  %v329 = vrot.slane %v328, 1
  %v330 = vadd.f32 %v328, %v329
  %v331 = vmul.f32 %v330, %v94
  %v332 = vmul.f32 %v319, %v319
  %v333 = vsub.f32 %v331, %v332
  %v334 = vmax.f32 %v333, 0.0
  %v335 = vadd.f32 %v334, 1e-05
  %v336 = vrsqrt.pop %v335
  %v337 = vmul.f32 %v308, %v336
  %v338 = vmul.f32 %v319, %v337
  %v339 = vsub.f32 %v309, %v338
  %v340 = vlaneseq
  %v341 = vshrl.u32 %v340, 7
  %v342 = vsub.s32 0, %v341
  %v343 = vrot.slane %v337, %v342
  %v344 = vmul.f32 %v302, %v343
  %v345 = vmul.f32 %v305, %v343
  %v346 = vlaneseq
  %v347 = vshrl.u32 %v346, 7
  %v348 = vsub.s32 0, %v347
  %v349 = vrot.slane %v339, %v348
  %v350 = vadd.f32 %v344, %v349
  %v351 = vadd.f32 %v345, %v349
  %vm352 = vcmp.gt.f32.partialorder %v350, 0.0
  %vm353 = vcmp.gt.f32.partialorder %v351, 0.0
  %v354 = vmul.f32 %v350, 0.2
  %v355 = vmul.f32 %v351, 0.2
  %v356 = vsel %vm352, %v350, %v354
  %v357 = vsel %vm353, %v351, %v355
  %v358 = vld [vmem:[%s2 + $0x6] sm:$0x1]
  %v359 = vld [vmem:[%s2 + $0x7] sm:$0x1]
  %v360 = vlaneseq
  %v361 = vshrl.u32 %v360, 7
  %v362 = vsub.s32 0, %v361
  %v363 = vrot.slane %v358, %v362
  %v364 = vmul.f32 %v356, %v363
  %v365 = vmul.f32 %v357, %v363
  %v366 = vsel %vm38, %v364, 0.0
  %367 = vadd.xlane.f32.xlu0 %v366
  %v368 = vpop.xlane.xlu0 %367
  %v369 = vsel %vm38, %v365, 0.0
  %370 = vadd.xlane.f32.xlu0 %v369
  %v371 = vpop.xlane.xlu0 %370
  %v372 = vlaneseq
  %v373 = vshrl.u32 %v372, 7
  %v374 = vsub.s32 0, %v373
  %v375 = vrot.slane %v359, %v374
  %v376 = vadd.f32 %v368, %v375
  %v377 = vadd.f32 %v371, %v375
  %v378 = vxor.u32 %v376, 2147483648
  %v379 = vxor.u32 %v377, 2147483648
  %v380 = vmul.f32 %v378, 1.442695
  %v381 = vpow.pop %v380
  %v382 = vmul.f32 %v379, 1.442695
  %v383 = vpow.pop %v382
  %v384 = vadd.f32 %v381, 1.0
  %v385 = vadd.f32 %v383, 1.0
  %v386 = vrcp.pop %v384
  %v387 = vmul.f32 1.0, %v386
  %v388 = vrcp.pop %v385
  %v389 = vmul.f32 1.0, %v388
  %vm390 = vcmask 7168
  %391 = vst.msk [vmem:[%s3] sm:$0xff] %vm390, %v387
  %392 = vst.msk [vmem:[%s3 + $0x8] sm:$0xff] %vm390, %v389
  // Predicated region
  $region14: #{discriminator_latent.1} parent=0 // pred_check
    _
  $region15: #{discriminator_latent.1} parent=0 // pred_check_branch
    %394 = sbr.rel (0) target = $region17
  $region16: #{discriminator_latent.1} parent=0 // pred_region
    _
  $region17: #{discriminator_latent.1} parent=0 // pred_fallthru
    _
  // Predicated region
  $region18: #{discriminator_latent.1} parent=0 // pred_check
    _
  $region19: #{discriminator_latent.1} parent=0 // pred_check_branch
    %396 = sbr.rel (0) target = $region21
  $region20: #{discriminator_latent.1} parent=0 // pred_region
    _
  $region21: #{discriminator_latent.1} parent=0 // pred_fallthru
    _

</llo_original>
